<compile_context>
chip_gen: v6e
topology: v6e:2x2x1
jax: 0.10.0
libtpu: 0.0.40
codegen_flags: <defaults>
</compile_context>

<pallas_src>
import functools

import jax
import jax.numpy as jnp
from jax.experimental import pallas as pl
from jax.experimental.pallas import tpu as pltpu

_LANE = 128


def _round_up(x, m):
    return (x + m - 1) // m * m


def _lane_pad(P):
    """Pad pred_len to a multiple of 128 (lane-dense stores) only when the extra
    weight/output traffic is modest (<= ~33%, e.g. 96 -> 128).  Tiny P stays unpadded."""
    Pp = _round_up(P, _LANE)
    return Pp if (Pp != P and 3 * Pp <= 4 * P) else P


@functools.lru_cache(maxsize=1)
def _vmem_budget():
    """(scoped_vmem_limit_bytes, double_buffered_block_budget_bytes), generation-gated."""
    cap = None
    try:
        info = pltpu.get_tpu_info()
        cap = int(getattr(info, "vmem_capacity_bytes", 0)) or None
    except Exception:
        cap = None
    if cap is None:
        cap = 64 * 1024 * 1024                      # conservative (v7x-sized) fallback
    # 128 MiB chips (v5e/v6e) -> 64 MiB scoped limit; 64 MiB (v7x) -> 32 MiB.
    limit = min(96 * 2**20, max(32 * 2**20, cap // 2))
    budget = (limit * 3) // 4                       # headroom under the scoped limit
    return limit, budget


# --------------------- parameter preparation (one-time, at load) ---------------------

def prepare_predict_params(weight, bias, *, individual, compute_dtype=None):
    """One-time parameter prep (call at parameter-load time, NOT per forward call).

    individual=True : weight (C, P, S), bias (C, P)  -> returns ((C, S, Pp), (C, Pp))
    individual=False: weight (P, S),    bias (P,)    -> returns ((S, Pp),    (1, Pp))
    Pp = lane-padded pred_len (multiple of 128) when beneficial, else P.
    compute_dtype (e.g. jnp.bfloat16) casts the weight only; accumulation stays f32.
    """
    if individual:
        w = jnp.swapaxes(weight, 1, 2)                      # (C, S, P): one-time transpose
        P = w.shape[-1]
        Pp = _lane_pad(P)
        if Pp != P:
            w = jnp.pad(w, ((0, 0), (0, 0), (0, Pp - P)))
            bias = jnp.pad(bias, ((0, 0), (0, Pp - P)))
        b = bias                                            # (C, Pp)
    else:
        w = weight.T                                        # (S, P): one-time transpose
        P = w.shape[-1]
        Pp = _lane_pad(P)
        if Pp != P:
            w = jnp.pad(w, ((0, 0), (0, Pp - P)))
            bias = jnp.pad(bias, ((0, Pp - P),))
        b = bias.reshape(1, Pp)                             # (1, Pp)
    if compute_dtype is not None:
        w = w.astype(compute_dtype)
    return w, b


# --------------------- shared-weight path: one flattened GEMM ---------------------

def _predict_shared_kernel(x_ref, w_ref, b_ref, o_ref):
    # x_ref: (tm, S), w_ref: (S, Pp), b_ref: (1, Pp), o_ref: (tm, Pp)
    x = x_ref[...]
    w = w_ref[...]
    if x.dtype != w.dtype:
        x = x.astype(w.dtype)                               # optional bf16 MXU inputs
    y = jnp.dot(x, w, preferred_element_type=jnp.float32)
    o_ref[...] = (y + b_ref[...].astype(jnp.float32)).astype(o_ref.dtype)
    # TODO(synk): dropout omitted — identity at inference (PyTorch eval mode).


def _predict_shared(x, w, b, pred_len):
    # x: (B, C, S); w: (S, Pp); b: (1, Pp)
    B, C, S = x.shape
    Pp = w.shape[1]
    M = B * C
    x2 = x.reshape(M, S)                                    # contiguous view, no transpose

    limit, budget = _vmem_budget()
    xi, wi = x.dtype.itemsize, w.dtype.itemsize

    resident = 2 * (S * Pp + Pp) * wi                       # grid-invariant weight + bias
    per_row = 2 * (S + Pp) * xi                             # double-buffered x row + out row
    tm = (budget - resident) // max(per_row, 1)
    tm = max(8, min(2048, (tm // 8) * 8))
    if M <= tm:
        # Full M fits one block; still split large work so both v7x cores are fed.
        tm = _round_up(pl.cdiv(M, 2), 8) if M >= 256 else M
    grid_m = pl.cdiv(M, tm)                                 # partial tail block is masked

    out2 = pl.pallas_call(
        _predict_shared_kernel,
        out_shape=jax.ShapeDtypeStruct((M, Pp), x.dtype),
        grid_spec=pltpu.PrefetchScalarGridSpec(
            num_scalar_prefetch=0,
            grid=(grid_m,),
            in_specs=[
                pl.BlockSpec((tm, S), lambda i: (i, 0)),
                pl.BlockSpec((S, Pp), lambda i: (0, 0)),    # weight resident across M tiles
                pl.BlockSpec((1, Pp), lambda i: (0, 0)),    # bias resident across M tiles
            ],
            out_specs=pl.BlockSpec((tm, Pp), lambda i: (i, 0)),
        ),
        compiler_params=pltpu.CompilerParams(
            dimension_semantics=("parallel",),
            vmem_limit_bytes=limit),
        cost_estimate=pl.CostEstimate(
            flops=2 * M * S * Pp,
            transcendentals=0,
            bytes_accessed=M * S * xi + S * Pp * wi + Pp * wi + M * Pp * xi),
    )(x2, w, b)

    out = out2.reshape(B, C, Pp)                            # contiguous view
    return out if Pp == pred_len else out[..., :pred_len]


# --------------------- individual path: Cb channels per grid step ---------------------

def _predict_individual_kernel(x_ref, w_ref, b_ref, o_ref):
    # x_ref: (B, Cb, S), w_ref: (Cb, S, Pp), b_ref: (Cb, Pp), o_ref: (B, Cb, Pp)
    x = x_ref[...]
    w = w_ref[...]
    if x.dtype != w.dtype:
        x = x.astype(w.dtype)                               # optional bf16 MXU inputs
    # Single batched contraction (channel = batch dim): Cb back-to-back MXU matmuls,
    # no per-channel Python unroll and no middle-dim slicing.
    y = jax.lax.dot_general(
        x, w,
        dimension_numbers=(((2,), (1,)), ((1,), (0,))),
        preferred_element_type=jnp.float32)                 # (Cb, B, Pp)
    y = jnp.transpose(y, (1, 0, 2))                         # (B, Cb, Pp), in-VMEM relayout
    o_ref[...] = (y + b_ref[...][None].astype(jnp.float32)).astype(o_ref.dtype)
    # TODO(synk): dropout omitted — identity at inference (PyTorch eval mode).


def _pick_channel_block(C, B, S, Pp, x_item, w_item, budget):
    """Channel block: multiple of 8 (or == C for tiny C), VMEM-budget bound, and yielding
    >= 2 grid steps for non-trivial C so both v7x TensorCores get work."""
    per_c = 2 * (B * S * x_item + S * Pp * w_item + Pp * w_item + B * Pp * x_item)
    cb = budget // max(per_c, 1)
    if cb >= C:
        return _round_up(pl.cdiv(C, 2), 8) if C >= 16 else C
    return max(8, (cb // 8) * 8)


def _predict_individual(x, w, b, pred_len):
    # x: (B, C, S); w: (C, S, Pp); b: (C, Pp)
    B, C, S = x.shape
    Pp = w.shape[-1]

    limit, budget = _vmem_budget()
    xi, wi = x.dtype.itemsize, w.dtype.itemsize
    cb = _pick_channel_block(C, B, S, Pp, xi, wi, budget)
    grid_c = pl.cdiv(C, cb)                                 # partial tail block is masked

    out = pl.pallas_call(
        _predict_individual_kernel,
        out_shape=jax.ShapeDtypeStruct((B, C, Pp), x.dtype),  # native layout: no wrapper transpose
        grid_spec=pltpu.PrefetchScalarGridSpec(
            num_scalar_prefetch=0,
            grid=(grid_c,),
            in_specs=[
                pl.BlockSpec((B, cb, S), lambda g: (0, g, 0)),
                pl.BlockSpec((cb, S, Pp), lambda g: (g, 0, 0)),
                pl.BlockSpec((cb, Pp), lambda g: (g, 0)),
            ],
            out_specs=pl.BlockSpec((B, cb, Pp), lambda g: (0, g, 0)),
        ),
        compiler_params=pltpu.CompilerParams(
            dimension_semantics=("parallel",),
            vmem_limit_bytes=limit),
        cost_estimate=pl.CostEstimate(
            flops=2 * B * C * S * Pp,
            transcendentals=0,
            bytes_accessed=B * C * S * xi + C * S * Pp * wi + C * Pp * wi + B * C * Pp * xi),
    )(x, w, b)

    return out if Pp == pred_len else out[..., :pred_len]


# --------------------- public wrappers ---------------------

def predict_forward(x, weight_prepared, bias_prepared, *, individual, pred_len):
    """Forward of PyTorch `Predict` (eval mode) on params from `prepare_predict_params`.
    x: (B, C, S) -> (B, C, pred_len)."""
    if individual:
        return _predict_individual(x, weight_prepared, bias_prepared, pred_len)
    return _predict_shared(x, weight_prepared, bias_prepared, pred_len)


def predict_forward_torch_layout(x, weight, bias, *, individual):
    """Convenience wrapper taking PyTorch-layout weights (does the one-time prep inline).
    Prefer prepare_predict_params + predict_forward so the weight transpose isn't per-call."""
    pred_len = weight.shape[1] if individual else weight.shape[0]
    w, b = prepare_predict_params(weight, bias, individual=individual)
    return predict_forward(x, w, b, individual=individual, pred_len=pred_len)


if __name__ == "__main__":
    def run_case(B, C, S, P, key):
        kx, kwi, kbi, kws, kbs = jax.random.split(key, 5)
        x = jax.random.normal(kx, (B, C, S), dtype=jnp.float32)

        # individual=True parameters: per-channel Linear(S, P) (PyTorch weight layout (P, S)).
        w_ind = jax.random.normal(kwi, (C, P, S), dtype=jnp.float32) * 0.1
        b_ind = jax.random.normal(kbi, (C, P), dtype=jnp.float32) * 0.1
        # individual=False parameters: shared Linear(S, P).
        w_sh = jax.random.normal(kws, (P, S), dtype=jnp.float32) * 0.1
        b_sh = jax.random.normal(kbs, (P,), dtype=jnp.float32) * 0.1

        wi_p, bi_p = prepare_predict_params(w_ind, b_ind, individual=True)
        ws_p, bs_p = prepare_predict_params(w_sh, b_sh, individual=False)

        out_i = jax.block_until_ready(
            predict_forward(x, wi_p, bi_p, individual=True, pred_len=P))
        out_s = jax.block_until_ready(
            predict_forward(x, ws_p, bs_p, individual=False, pred_len=P))

        ref_i = jnp.einsum("bcs,cps->bcp", x, w_ind, precision="highest") + b_ind[None, :, :]
        ref_s = jnp.einsum("bcs,ps->bcp", x, w_sh, precision="highest") + b_sh[None, None, :]

        assert out_i.shape == (B, C, P) and out_s.shape == (B, C, P)
        assert jnp.allclose(out_i, ref_i, atol=1e-4, rtol=1e-4)
        assert jnp.allclose(out_s, ref_s, atol=1e-4, rtol=1e-4)

    key = jax.random.PRNGKey(0)
    k1, k2 = jax.random.split(key)
    # Tiny case: single-step grid, full-extent blocks, no padding.
    run_case(2, 4, 8, 16, k1)
    # Exercises masked partial channel tail (C=20, cb=16), lane padding (P=96 -> 128),
    # and the 2-step 'parallel' grid for the individual path.
    run_case(2, 20, 64, 96, k2)

    print("KERNEL_OK")
</pallas_src>

<mosaic_0001>
module attributes {stable_mosaic.version = 11 : i64} {
  func.func @_predict_individual_kernel(%arg0: i32, %arg1: memref<2x4x8xf32, #tpu.memory_space<vmem>>, %arg2: memref<4x8x16xf32, #tpu.memory_space<vmem>>, %arg3: memref<4x16xf32, #tpu.memory_space<vmem>>, %arg4: memref<2x4x16xf32, #tpu.memory_space<vmem>>) attributes {dimension_semantics = [#tpu.dimension_semantics<parallel>], iteration_bounds = array<i64: 1>, scalar_prefetch = 0 : i64, scratch_operands = 0 : i64, tpu.core_type = #tpu.core_type<tc>, window_params = [{transform_indices = @transform_0, window_bounds = array<i64: 2, 4, 8>}, {transform_indices = @transform_1, window_bounds = array<i64: 4, 8, 16>}, {transform_indices = @transform_2, window_bounds = array<i64: 4, 16>}, {transform_indices = @transform_3, window_bounds = array<i64: 2, 4, 16>}]} {
    %c0 = arith.constant 0 : index
    %c0_0 = arith.constant 0 : index
    %c0_1 = arith.constant 0 : index
    %0 = vector.load %arg1[%c0, %c0_0, %c0_1] : memref<2x4x8xf32, #tpu.memory_space<vmem>>, vector<2x4x8xf32>
    %c0_2 = arith.constant 0 : index
    %c0_3 = arith.constant 0 : index
    %c0_4 = arith.constant 0 : index
    %1 = vector.load %arg2[%c0_2, %c0_3, %c0_4] : memref<4x8x16xf32, #tpu.memory_space<vmem>>, vector<4x8x16xf32>
    %cst = arith.constant dense<0.000000e+00> : vector<4x2x16xf32>
    %2 = tpu.matmul %0, %1, %cst {dimension_numbers = #tpu.dot_dimension_numbers<[2], [1], [0], [2], [0, 1, 0, 0, 1, 2], [1], [0]>} : vector<2x4x8xf32>, vector<4x8x16xf32>, vector<4x2x16xf32> -> vector<4x2x16xf32>
    %3 = tpu.transpose %2, [1, 0, 2] : vector<4x2x16xf32> -> vector<2x4x16xf32>
    %c0_5 = arith.constant 0 : index
    %c0_6 = arith.constant 0 : index
    %4 = vector.load %arg3[%c0_5, %c0_6] : memref<4x16xf32, #tpu.memory_space<vmem>>, vector<4x16xf32>
    %5 = vector.shape_cast %4 : vector<4x16xf32> to vector<1x4x16xf32>
    %6 = vector.broadcast %5 : vector<1x4x16xf32> to vector<2x4x16xf32>
    %7 = arith.addf %3, %6 : vector<2x4x16xf32>
    %c0_7 = arith.constant 0 : index
    %c0_8 = arith.constant 0 : index
    %c0_9 = arith.constant 0 : index
    %8 = vector.load %arg4[%c0_7, %c0_8, %c0_9] : memref<2x4x16xf32, #tpu.memory_space<vmem>>, vector<2x4x16xf32>
    tpu.vector_store %arg4[%c0_7, %c0_8, %c0_9], %7 {strides = array<i32>} : memref<2x4x16xf32, #tpu.memory_space<vmem>>, vector<2x4x16xf32>,
    return
  }
  func.func @transform_0(%arg0: i32) -> (i32, i32, i32) {
    %c0_i32 = arith.constant 0 : i32
    %c0_i32_0 = arith.constant 0 : i32
    %c0_i32_1 = arith.constant 0 : i32
    return %c0_i32, %arg0, %c0_i32_0 : i32, i32, i32
  }
  func.func @transform_1(%arg0: i32) -> (i32, i32, i32) {
    %c0_i32 = arith.constant 0 : i32
    %c0_i32_0 = arith.constant 0 : i32
    %c0_i32_1 = arith.constant 0 : i32
    return %arg0, %c0_i32, %c0_i32_0 : i32, i32, i32
  }
  func.func @transform_2(%arg0: i32) -> (i32, i32) {
    %c0_i32 = arith.constant 0 : i32
    %c0_i32_0 = arith.constant 0 : i32
    return %arg0, %c0_i32 : i32, i32
  }
  func.func @transform_3(%arg0: i32) -> (i32, i32, i32) {
    %c0_i32 = arith.constant 0 : i32
    %c0_i32_0 = arith.constant 0 : i32
    %c0_i32_1 = arith.constant 0 : i32
    return %c0_i32, %arg0, %c0_i32_0 : i32, i32, i32
  }
}

</mosaic_0001>

<llo_original>
// kernel: tpu_custom_call.1
$region0: #{tpu_custom_call.1}
  #allocation0 [shape = 'u32[]', space=smem, size = 0x4, offset = 0x4, fixed_abs, tag = 'smem constant byte address 0x4 - core index']
  #allocation1 [shape = 'u32[144,128]{1,0:T(1,128)}', space=vmem, size = 0x12000, scoped, tag = 'internal scratch']
  %s0 = inlined_call_operand.hbm [shape: f32[2,4,8], index: 0, kind: input, shape index: {}]
  %s1 = inlined_call_operand.hbm [shape: f32[4,8,16], index: 1, kind: input, shape index: {}]
  %s2 = inlined_call_operand.hbm [shape: f32[4,16], index: 2, kind: input, shape index: {}]
  %s3 = inlined_call_operand.hbm [shape: f32[2,4,16], index: 3, kind: output, shape index: {}]
  %s4 = sld [smem:[#allocation0]]
  $region34: #{tpu_custom_call.1} parent=0
    _
  %s6 = ssub.s32 1, %s4
  %s7 = scalar_select 0, %s6, %s4
  $region1: #{tpu_custom_call.1} parent=0
    #allocation2 [shape = 'u8[4096]{0}', space=vmem, size = 0x1000, scoped, tag = 'input window, operand 0, single buffered']
    #allocation3 [shape = 's32[1]{0}', space=sflag, size = 0x4, scoped, tag = 'scoped memory for tpu_custom_call.1']
    #allocation4 [shape = 's32[1]{0}', space=sflag, size = 0x4, scoped, tag = 'scoped memory for tpu_custom_call.1']
    #allocation5 [shape = 'u8[16384]{0}', space=vmem, size = 0x4000, scoped, tag = 'input window, operand 1, single buffered']
    #allocation6 [shape = 's32[1]{0}', space=sflag, size = 0x4, scoped, tag = 'scoped memory for tpu_custom_call.1']
    #allocation7 [shape = 'u8[2048]{0}', space=vmem, size = 0x800, scoped, tag = 'input window, operand 2, single buffered']
    #allocation8 [shape = 'u8[4096]{0}', space=vmem, size = 0x1000, scoped, tag = 'output window, operand 0, single buffered']
    %8 = vsyncpa [#allocation3], 0
    %9 = vsyncpa [#allocation6], 0
    %10 = vsyncpa [#allocation4], 0
    // Predicated region
    $region2: #{tpu_custom_call.1} parent=1 // pred_check
      _
    $region3: #{tpu_custom_call.1} parent=1 // pred_check_branch
      %12 = sbr.rel (0) target = $region5
    $region4: #{tpu_custom_call.1} parent=1 // pred_region
      %s14 = ssub.s32 128, 128
      %15 = vsyncadd [#allocation3], %s14
      %s16 = sshll.u32 [#allocation2], 4
      %s17 = int_to_ptr.vmem [resolvable:$true] %s16
      %22 = dma.hbm_to_vmem [thread:$0]  %s0, 128, %s17, [#allocation3], 64, 64, 4
    $region5: #{tpu_custom_call.1} parent=1 // pred_fallthru
      _
    // Predicated region
    $region6: #{tpu_custom_call.1} parent=1 // pred_check
      _
    $region7: #{tpu_custom_call.1} parent=1 // pred_check_branch
      %24 = sbr.rel (0) target = $region9
    $region8: #{tpu_custom_call.1} parent=1 // pred_region
      %s26 = ssub.s32 512, 512
      %27 = vsyncadd [#allocation6], %s26
      %s28 = sshll.u32 [#allocation5], 4
      %s29 = int_to_ptr.vmem [resolvable:$true] %s28
      %34 = dma.hbm_to_vmem [thread:$0]  %s1, 512, %s29, [#allocation6], 128, 128, 8
    $region9: #{tpu_custom_call.1} parent=1 // pred_fallthru
      _
    // Predicated region
    $region10: #{tpu_custom_call.1} parent=1 // pred_check
      _
    $region11: #{tpu_custom_call.1} parent=1 // pred_check_branch
      %36 = sbr.rel (0) target = $region13
    $region12: #{tpu_custom_call.1} parent=1 // pred_region
      %s38 = ssub.s32 64, 64
      %39 = vsyncadd [#allocation6], %s38
      %s41 = sshll.u32 [#allocation7], 4
      %s42 = int_to_ptr.vmem [resolvable:$true] %s41
      %44 = dma.hbm_to_vmem [thread:$0]  %s2, 64, %s42, [#allocation6]
    $region13: #{tpu_custom_call.1} parent=1 // pred_fallthru
      _
    // Predicated region
    $region14: #{tpu_custom_call.1} parent=1 // pred_check
      _
    $region15: #{tpu_custom_call.1} parent=1 // pred_check_branch
      %46 = sbr.rel (0) target = $region17
    $region16: #{tpu_custom_call.1} parent=1 // pred_region
      %47 = dma.done [#allocation3], 128
    $region17: #{tpu_custom_call.1} parent=1 // pred_fallthru
      _
    // Predicated region
    $region18: #{tpu_custom_call.1} parent=1 // pred_check
      _
    $region19: #{tpu_custom_call.1} parent=1 // pred_check_branch
      %49 = sbr.rel (0) target = $region21
    $region20: #{tpu_custom_call.1} parent=1 // pred_region
      %50 = dma.done [#allocation6], 512
    $region21: #{tpu_custom_call.1} parent=1 // pred_fallthru
      _
    // Predicated region
    $region22: #{tpu_custom_call.1} parent=1 // pred_check
      _
    $region23: #{tpu_custom_call.1} parent=1 // pred_check_branch
      %52 = sbr.rel (0) target = $region25
    $region24: #{tpu_custom_call.1} parent=1 // pred_region
      %53 = dma.done [#allocation6], 64
    $region25: #{tpu_custom_call.1} parent=1 // pred_fallthru
      _
    %v54 = vld [vmem:[#allocation5] sm:$0xff]
    %v55 = vld [vmem:[#allocation5 + $0x8] sm:$0xff]
    %v56 = vld [vmem:[#allocation5 + $0x10] sm:$0xff]
    %v57 = vld [vmem:[#allocation5 + $0x18] sm:$0xff]
    %v58 = vld [vmem:[#allocation2] sm:$0xf]
    %v60 = vunpack.c.l.s4 1983009808
    %v61 = vunpack.c.0.s8 %v60
    %v62 = vlaneseq
    %v63 = vshrl.u32 %v62, 7
    %v64 = vsub.s32 %v61, %v63
    %v65 = vrot.slane %v58, %v64
    %v66 = vld [vmem:[#allocation2 + $0x4] sm:$0xf]
    %v68 = vunpack.c.l.s4 1983009808
    %v69 = vunpack.c.0.s8 %v68
    %v70 = vlaneseq
    %v71 = vshrl.u32 %v70, 7
    %v72 = vsub.s32 %v69, %v71
    %v73 = vrot.slane %v66, %v72
    %v74 = vcombine.low %v65, %v73
    %v75 = vcombine.high %v65, %v73
    %v77 = vunpack.c.l.s4 1934713408
    %v78 = vunpack.c.0.s8 %v77
    %v79 = vlaneseq
    %v80 = vshrl.u32 %v79, 7
    %v81 = vsub.s32 %v78, %v80
    %v82 = vrot.slane %v74, %v81
    %v84 = vunpack.c.l.s4 1934713408
    %v85 = vunpack.c.0.s8 %v84
    %v86 = vlaneseq
    %v87 = vshrl.u32 %v86, 7
    %v88 = vsub.s32 %v85, %v87
    %v89 = vrot.slane %v75, %v88
    %v90 = vcombine.high %v82, 0.0
    %v91 = vcombine.high %v89, 0.0
    %vm92 = vcmask 64512
    %v94 = vsel %vm92, %v82, 0
    %96 = vmatprep.subr.mxu0 0.0
    %97 = vmatpush1.msra.mxu0 0.0
    %98 = vmatprep.subr.mxu0 0.0
    %99 = vmatpush1.msra.mxu0 0.0
    %100 = vmatprep.subr.mxu0 0.0
    %101 = vmatpush1.msra.mxu0 0.0
    %102 = vmatprep.subr.mxu0 0.0
    %103 = vmatpush1.msra.mxu0 0.0
    %104 = vmatprep.subr.mxu0 0.0
    %105 = vmatpush1.msra.mxu0 0.0
    %106 = vmatprep.subr.mxu0 0.0
    %107 = vmatpush1.msra.mxu0 0.0
    %108 = vmatprep.subr.mxu0 0.0
    %109 = vmatpush1.msra.mxu0 0.0
    %110 = vmatprep.subr.mxu0 0.0
    %111 = vmatpush1.msra.mxu0 0.0
    %112 = vmatprep.subr.mxu0 0.0
    %113 = vmatpush1.msra.mxu0 0.0
    %114 = vmatprep.subr.mxu0 0.0
    %115 = vmatpush1.msra.mxu0 0.0
    %116 = vmatprep.subr.mxu0 0.0
    %117 = vmatpush1.msra.mxu0 0.0
    %118 = vmatprep.subr.mxu0 0.0
    %119 = vmatpush1.msra.mxu0 0.0
    %120 = vmatprep.subr.mxu0 0.0
    %121 = vmatpush1.msra.mxu0 0.0
    %122 = vmatprep.subr.mxu0 0.0
    %123 = vmatpush1.msra.mxu0 0.0
    %124 = vmatprep.subr.mxu0 0.0
    %125 = vmatpush1.msra.mxu0 0.0
    %126 = vmatprep.subr.mxu0 0.0
    %127 = vmatpush1.msra.mxu0 %v54
    %128 = vmatprep.subr.mxu0 0.0
    %129 = vmatpush2.msra.mxu0 0.0
    %130 = vmatprep.subr.mxu0 0.0
    %131 = vmatpush2.msra.mxu0 0.0
    %132 = vmatprep.subr.mxu0 0.0
    %133 = vmatpush2.msra.mxu0 0.0
    %134 = vmatprep.subr.mxu0 0.0
    %135 = vmatpush2.msra.mxu0 0.0
    %136 = vmatprep.subr.mxu0 0.0
    %137 = vmatpush2.msra.mxu0 0.0
    %138 = vmatprep.subr.mxu0 0.0
    %139 = vmatpush2.msra.mxu0 0.0
    %140 = vmatprep.subr.mxu0 0.0
    %141 = vmatpush2.msra.mxu0 0.0
    %142 = vmatprep.subr.mxu0 0.0
    %143 = vmatpush2.msra.mxu0 0.0
    %144 = vmatprep.subr.mxu0 0.0
    %145 = vmatpush2.msra.mxu0 0.0
    %146 = vmatprep.subr.mxu0 0.0
    %147 = vmatpush2.msra.mxu0 0.0
    %148 = vmatprep.subr.mxu0 0.0
    %149 = vmatpush2.msra.mxu0 0.0
    %150 = vmatprep.subr.mxu0 0.0
    %151 = vmatpush2.msra.mxu0 0.0
    %152 = vmatprep.subr.mxu0 0.0
    %153 = vmatpush2.msra.mxu0 0.0
    %154 = vmatprep.subr.mxu0 0.0
    %155 = vmatpush2.msra.mxu0 0.0
    %156 = vmatprep.subr.mxu0 0.0
    %157 = vmatpush2.msra.mxu0 0.0
    %158 = vmatprep.subr.mxu0 0.0
    %159 = vmatpush2.msra.mxu0 0.0
    %160 = vmatprep.mubr.f32.mxu0 0.0
    %161 = vmatmul.mubr.f32.gmra.mxu0 %v94
    %v162 = vpop.f32.mrf.mxu0
    %v163 = vadd.f32 0.0, %v162
    %v164 = vpop.f32.mrf.mxu0
    %165 = vdwg.mxu0
    %v167 = vsel %vm92, %v90, 0
    %169 = vmatprep.subr.mxu0 0.0
    %170 = vmatpush1.msra.mxu0 0.0
    %171 = vmatprep.subr.mxu0 0.0
    %172 = vmatpush1.msra.mxu0 0.0
    %173 = vmatprep.subr.mxu0 0.0
    %174 = vmatpush1.msra.mxu0 0.0
    %175 = vmatprep.subr.mxu0 0.0
    %176 = vmatpush1.msra.mxu0 0.0
    %177 = vmatprep.subr.mxu0 0.0
    %178 = vmatpush1.msra.mxu0 0.0
    %179 = vmatprep.subr.mxu0 0.0
    %180 = vmatpush1.msra.mxu0 0.0
    %181 = vmatprep.subr.mxu0 0.0
    %182 = vmatpush1.msra.mxu0 0.0
    %183 = vmatprep.subr.mxu0 0.0
    %184 = vmatpush1.msra.mxu0 0.0
    %185 = vmatprep.subr.mxu0 0.0
    %186 = vmatpush1.msra.mxu0 0.0
    %187 = vmatprep.subr.mxu0 0.0
    %188 = vmatpush1.msra.mxu0 0.0
    %189 = vmatprep.subr.mxu0 0.0
    %190 = vmatpush1.msra.mxu0 0.0
    %191 = vmatprep.subr.mxu0 0.0
    %192 = vmatpush1.msra.mxu0 0.0
    %193 = vmatprep.subr.mxu0 0.0
    %194 = vmatpush1.msra.mxu0 0.0
    %195 = vmatprep.subr.mxu0 0.0
    %196 = vmatpush1.msra.mxu0 0.0
    %197 = vmatprep.subr.mxu0 0.0
    %198 = vmatpush1.msra.mxu0 0.0
    %199 = vmatprep.subr.mxu0 0.0
    %200 = vmatpush1.msra.mxu0 %v55
    %201 = vmatprep.subr.mxu0 0.0
    %202 = vmatpush2.msra.mxu0 0.0
    %203 = vmatprep.subr.mxu0 0.0
    %204 = vmatpush2.msra.mxu0 0.0
    %205 = vmatprep.subr.mxu0 0.0
    %206 = vmatpush2.msra.mxu0 0.0
    %207 = vmatprep.subr.mxu0 0.0
    %208 = vmatpush2.msra.mxu0 0.0
    %209 = vmatprep.subr.mxu0 0.0
    %210 = vmatpush2.msra.mxu0 0.0
    %211 = vmatprep.subr.mxu0 0.0
    %212 = vmatpush2.msra.mxu0 0.0
    %213 = vmatprep.subr.mxu0 0.0
    %214 = vmatpush2.msra.mxu0 0.0
    %215 = vmatprep.subr.mxu0 0.0
    %216 = vmatpush2.msra.mxu0 0.0
    %217 = vmatprep.subr.mxu0 0.0
    %218 = vmatpush2.msra.mxu0 0.0
    %219 = vmatprep.subr.mxu0 0.0
    %220 = vmatpush2.msra.mxu0 0.0
    %221 = vmatprep.subr.mxu0 0.0
    %222 = vmatpush2.msra.mxu0 0.0
    %223 = vmatprep.subr.mxu0 0.0
    %224 = vmatpush2.msra.mxu0 0.0
    %225 = vmatprep.subr.mxu0 0.0
    %226 = vmatpush2.msra.mxu0 0.0
    %227 = vmatprep.subr.mxu0 0.0
    %228 = vmatpush2.msra.mxu0 0.0
    %229 = vmatprep.subr.mxu0 0.0
    %230 = vmatpush2.msra.mxu0 0.0
    %231 = vmatprep.subr.mxu0 0.0
    %232 = vmatpush2.msra.mxu0 0.0
    %233 = vmatprep.mubr.f32.mxu0 0.0
    %234 = vmatmul.mubr.f32.gmra.mxu0 %v167
    %v235 = vpop.f32.mrf.mxu0
    %v236 = vadd.f32 0.0, %v235
    %v237 = vpop.f32.mrf.mxu0
    %238 = vdwg.mxu0
    %v240 = vsel %vm92, %v89, 0
    %242 = vmatprep.subr.mxu0 0.0
    %243 = vmatpush1.msra.mxu0 0.0
    %244 = vmatprep.subr.mxu0 0.0
    %245 = vmatpush1.msra.mxu0 0.0
    %246 = vmatprep.subr.mxu0 0.0
    %247 = vmatpush1.msra.mxu0 0.0
    %248 = vmatprep.subr.mxu0 0.0
    %249 = vmatpush1.msra.mxu0 0.0
    %250 = vmatprep.subr.mxu0 0.0
    %251 = vmatpush1.msra.mxu0 0.0
    %252 = vmatprep.subr.mxu0 0.0
    %253 = vmatpush1.msra.mxu0 0.0
    %254 = vmatprep.subr.mxu0 0.0
    %255 = vmatpush1.msra.mxu0 0.0
    %256 = vmatprep.subr.mxu0 0.0
    %257 = vmatpush1.msra.mxu0 0.0
    %258 = vmatprep.subr.mxu0 0.0
    %259 = vmatpush1.msra.mxu0 0.0
    %260 = vmatprep.subr.mxu0 0.0
    %261 = vmatpush1.msra.mxu0 0.0
    %262 = vmatprep.subr.mxu0 0.0
    %263 = vmatpush1.msra.mxu0 0.0
    %264 = vmatprep.subr.mxu0 0.0
    %265 = vmatpush1.msra.mxu0 0.0
    %266 = vmatprep.subr.mxu0 0.0
    %267 = vmatpush1.msra.mxu0 0.0
    %268 = vmatprep.subr.mxu0 0.0
    %269 = vmatpush1.msra.mxu0 0.0
    %270 = vmatprep.subr.mxu0 0.0
    %271 = vmatpush1.msra.mxu0 0.0
    %272 = vmatprep.subr.mxu0 0.0
    %273 = vmatpush1.msra.mxu0 %v56
    %274 = vmatprep.subr.mxu0 0.0
    %275 = vmatpush2.msra.mxu0 0.0
    %276 = vmatprep.subr.mxu0 0.0
    %277 = vmatpush2.msra.mxu0 0.0
    %278 = vmatprep.subr.mxu0 0.0
    %279 = vmatpush2.msra.mxu0 0.0
    %280 = vmatprep.subr.mxu0 0.0
    %281 = vmatpush2.msra.mxu0 0.0
    %282 = vmatprep.subr.mxu0 0.0
    %283 = vmatpush2.msra.mxu0 0.0
    %284 = vmatprep.subr.mxu0 0.0
    %285 = vmatpush2.msra.mxu0 0.0
    %286 = vmatprep.subr.mxu0 0.0
    %287 = vmatpush2.msra.mxu0 0.0
    %288 = vmatprep.subr.mxu0 0.0
    %289 = vmatpush2.msra.mxu0 0.0
    %290 = vmatprep.subr.mxu0 0.0
    %291 = vmatpush2.msra.mxu0 0.0
    %292 = vmatprep.subr.mxu0 0.0
    %293 = vmatpush2.msra.mxu0 0.0
    %294 = vmatprep.subr.mxu0 0.0
    %295 = vmatpush2.msra.mxu0 0.0
    %296 = vmatprep.subr.mxu0 0.0
    %297 = vmatpush2.msra.mxu0 0.0
    %298 = vmatprep.subr.mxu0 0.0
    %299 = vmatpush2.msra.mxu0 0.0
    %300 = vmatprep.subr.mxu0 0.0
    %301 = vmatpush2.msra.mxu0 0.0
    %302 = vmatprep.subr.mxu0 0.0
    %303 = vmatpush2.msra.mxu0 0.0
    %304 = vmatprep.subr.mxu0 0.0
    %305 = vmatpush2.msra.mxu0 0.0
    %306 = vmatprep.mubr.f32.mxu0 0.0
    %307 = vmatmul.mubr.f32.gmra.mxu0 %v240
    %v308 = vpop.f32.mrf.mxu0
    %v309 = vadd.f32 0.0, %v308
    %v310 = vpop.f32.mrf.mxu0
    %311 = vdwg.mxu0
    %v313 = vsel %vm92, %v91, 0
    %315 = vmatprep.subr.mxu0 0.0
    %316 = vmatpush1.msra.mxu0 0.0
    %317 = vmatprep.subr.mxu0 0.0
    %318 = vmatpush1.msra.mxu0 0.0
    %319 = vmatprep.subr.mxu0 0.0
    %320 = vmatpush1.msra.mxu0 0.0
    %321 = vmatprep.subr.mxu0 0.0
    %322 = vmatpush1.msra.mxu0 0.0
    %323 = vmatprep.subr.mxu0 0.0
    %324 = vmatpush1.msra.mxu0 0.0
    %325 = vmatprep.subr.mxu0 0.0
    %326 = vmatpush1.msra.mxu0 0.0
    %327 = vmatprep.subr.mxu0 0.0
    %328 = vmatpush1.msra.mxu0 0.0
    %329 = vmatprep.subr.mxu0 0.0
    %330 = vmatpush1.msra.mxu0 0.0
    %331 = vmatprep.subr.mxu0 0.0
    %332 = vmatpush1.msra.mxu0 0.0
    %333 = vmatprep.subr.mxu0 0.0
    %334 = vmatpush1.msra.mxu0 0.0
    %335 = vmatprep.subr.mxu0 0.0
    %336 = vmatpush1.msra.mxu0 0.0
    %337 = vmatprep.subr.mxu0 0.0
    %338 = vmatpush1.msra.mxu0 0.0
    %339 = vmatprep.subr.mxu0 0.0
    %340 = vmatpush1.msra.mxu0 0.0
    %341 = vmatprep.subr.mxu0 0.0
    %342 = vmatpush1.msra.mxu0 0.0
    %343 = vmatprep.subr.mxu0 0.0
    %344 = vmatpush1.msra.mxu0 0.0
    %345 = vmatprep.subr.mxu0 0.0
    %346 = vmatpush1.msra.mxu0 %v57
    %347 = vmatprep.subr.mxu0 0.0
    %348 = vmatpush2.msra.mxu0 0.0
    %349 = vmatprep.subr.mxu0 0.0
    %350 = vmatpush2.msra.mxu0 0.0
    %351 = vmatprep.subr.mxu0 0.0
    %352 = vmatpush2.msra.mxu0 0.0
    %353 = vmatprep.subr.mxu0 0.0
    %354 = vmatpush2.msra.mxu0 0.0
    %355 = vmatprep.subr.mxu0 0.0
    %356 = vmatpush2.msra.mxu0 0.0
    %357 = vmatprep.subr.mxu0 0.0
    %358 = vmatpush2.msra.mxu0 0.0
    %359 = vmatprep.subr.mxu0 0.0
    %360 = vmatpush2.msra.mxu0 0.0
    %361 = vmatprep.subr.mxu0 0.0
    %362 = vmatpush2.msra.mxu0 0.0
    %363 = vmatprep.subr.mxu0 0.0
    %364 = vmatpush2.msra.mxu0 0.0
    %365 = vmatprep.subr.mxu0 0.0
    %366 = vmatpush2.msra.mxu0 0.0
    %367 = vmatprep.subr.mxu0 0.0
    %368 = vmatpush2.msra.mxu0 0.0
    %369 = vmatprep.subr.mxu0 0.0
    %370 = vmatpush2.msra.mxu0 0.0
    %371 = vmatprep.subr.mxu0 0.0
    %372 = vmatpush2.msra.mxu0 0.0
    %373 = vmatprep.subr.mxu0 0.0
    %374 = vmatpush2.msra.mxu0 0.0
    %375 = vmatprep.subr.mxu0 0.0
    %376 = vmatpush2.msra.mxu0 0.0
    %377 = vmatprep.subr.mxu0 0.0
    %378 = vmatpush2.msra.mxu0 0.0
    %379 = vmatprep.mubr.f32.mxu0 0.0
    %380 = vmatmul.mubr.f32.gmra.mxu0 %v313
    %v381 = vpop.f32.mrf.mxu0
    %v382 = vadd.f32 0.0, %v381
    %v383 = vpop.f32.mrf.mxu0
    %384 = vdwg.mxu0
    %v385 = vcombine.low %v163, %v309
    %v387 = vunpack.c.l.s4 1983009808
    %v388 = vunpack.c.0.s8 %v387
    %v389 = vlaneseq
    %v390 = vshrl.u32 %v389, 7
    %v391 = vsub.s32 %v388, %v390
    %v392 = vrot.slane %v385, %v391
    %v393 = vcombine.low %v236, %v382
    %v395 = vunpack.c.l.s4 1983009808
    %v396 = vunpack.c.0.s8 %v395
    %v397 = vlaneseq
    %v398 = vshrl.u32 %v397, 7
    %v399 = vsub.s32 %v396, %v398
    %v400 = vrot.slane %v393, %v399
    %v401 = vcombine.low %v392, %v400
    %v403 = vunpack.c.l.s4 1934713408
    %v404 = vunpack.c.0.s8 %v403
    %v405 = vlaneseq
    %v406 = vshrl.u32 %v405, 7
    %v407 = vsub.s32 %v404, %v406
    %v408 = vrot.slane %v401, %v407
    %v409 = vcombine.high %v408, 0.0
    %v410 = vld [vmem:[#allocation7] sm:$0xf]
    %v411 = vadd.f32 %v408, %v410
    %v412 = vadd.f32 %v409, %v410
    %vm413 = vcmask 125952
    %414 = vst.msk [vmem:[#allocation8] sm:$0xf] %vm413, %v411
    %415 = vst.msk [vmem:[#allocation8 + $0x4] sm:$0xf] %vm413, %v412
    // Predicated region
    $region26: #{tpu_custom_call.1} parent=1 // pred_check
      _
    $region27: #{tpu_custom_call.1} parent=1 // pred_check_branch
      %417 = sbr.rel (0) target = $region29
    $region28: #{tpu_custom_call.1} parent=1 // pred_region
      %s419 = ssub.s32 128, 128
      %420 = vsyncadd [#allocation4], %s419
      %s421 = sshll.u32 [#allocation8], 4
      %s422 = int_to_ptr.vmem [resolvable:$true] %s421
      %427 = dma.vmem_to_hbm [thread:$0]  %s422, 128, %s3, [#allocation4], 64, 64, 4
    $region29: #{tpu_custom_call.1} parent=1 // pred_fallthru
      _
    // Predicated region
    $region30: #{tpu_custom_call.1} parent=1 // pred_check
      _
    $region31: #{tpu_custom_call.1} parent=1 // pred_check_branch
      %429 = sbr.rel (0) target = $region33
    $region32: #{tpu_custom_call.1} parent=1 // pred_region
      %430 = dma.done [#allocation4], 128
    $region33: #{tpu_custom_call.1} parent=1 // pred_fallthru
      _
    %431 = vsyncpa [#allocation3], 1
    %432 = vsyncpa [#allocation6], 1
    %433 = vsyncpa [#allocation4], 1

</llo_original>
